<compile_context>
chip_gen: v7x
topology: tpu7x:2x2x1
jax: 0.10.0
libtpu: 0.0.40
codegen_flags: <defaults>
</compile_context>

<pallas_src>
import functools
import math

import jax
import jax.numpy as jnp
from jax.experimental import pallas as pl
from jax.experimental.pallas import tpu as pltpu


def _round_up(x, mult):
    return ((x + mult - 1) // mult) * mult


def _pad_axis(x, axis, target):
    size = x.shape[axis]
    if size == target:
        return x
    widths = [(0, 0)] * x.ndim
    widths[axis] = (0, target - size)
    return jnp.pad(x, widths)


def _nbytes(shape, dtype):
    return math.prod(shape) * jnp.dtype(dtype).itemsize


def _model_entry_kernel(patches_ref, pool_ref, w1_ref, b1_ref, w2_ref, b2_ref,
                        w3_ref, b3_ref, out_ref, acc_ref, *,
                        tile_b, tile_t, inv_np):
    t = pl.program_id(1)

    # ---- init per-batch-tile pooled-sum accumulator -------------------------
    @pl.when(t == 0)
    def _():
        acc_ref[...] = jnp.zeros_like(acc_ref)

    # ---- backbone_module: patch-embed "conv" as bf16 matmul + GELU ----------
    x = patches_ref[...].reshape(tile_b * tile_t, -1)            # bf16 [M, Kp]
    tokens = jnp.dot(x, w1_ref[...], preferred_element_type=jnp.float32)
    tokens = jax.nn.gelu(tokens + b1_ref[...])                   # f32 [M, Dp]

    # ---- neck_module: linear projection + ReLU ------------------------------
    feats = jnp.dot(tokens.astype(jnp.bfloat16), w2_ref[...],
                    preferred_element_type=jnp.float32)
    feats = jnp.maximum(feats + b2_ref[...], 0.0)                # f32 [M, Np_]

    # ---- decoder pooling: per-batch token sum via block-diagonal MXU matmul -
    acc_ref[...] += jnp.dot(pool_ref[...], feats,
                            preferred_element_type=jnp.float32)  # [tile_b, Np_]

    # ---- decoder classifier on the last token tile --------------------------
    @pl.when(t == pl.num_programs(1) - 1)
    def _():
        pooled = acc_ref[...] * inv_np
        logits = jnp.dot(pooled, w3_ref[...],
                         preferred_element_type=jnp.float32) + b3_ref[...]
        out_ref[...] = logits.astype(out_ref.dtype)


def model_entry_forward(x, params, current_step=0, *, patch=4,
                        tile_tokens=None, tile_batch=None):
    """Forward pass equivalent to backbone_aio_entry.forward(input_var, step)."""
    del current_step  # not used by the reference forward
    B, C, H, W = x.shape
    p = patch
    hp, wp = H // p, W // p
    num_tokens = hp * wp
    K = C * p * p

    # NCHW -> patch tokens [B, Np, K] (glue reshape/transpose).
    # TODO(synk): fold this rearrangement into the pallas_call index_map to
    # avoid materializing a second HBM copy of the input for large images.
    xp = x.reshape(B, C, hp, p, wp, p)
    xp = jnp.transpose(xp, (0, 2, 4, 1, 3, 5))                   # B,hp,wp,C,p,p
    patches = xp.reshape(B, num_tokens, K)

    # ---- pad all contraction / lane dims to 128, cast MXU inputs to bf16 ----
    w1, b1 = params["w1"], params["b1"]
    w2, b2 = params["w2"], params["b2"]
    w3, b3 = params["w3"], params["b3"]
    D, N, ncls = w1.shape[1], w2.shape[1], w3.shape[1]
    K_pad, D_pad = _round_up(K, 128), _round_up(D, 128)
    N_pad, C_pad = _round_up(N, 128), _round_up(ncls, 128)

    patches_p = _pad_axis(patches, 2, K_pad).astype(jnp.bfloat16)
    w1p = _pad_axis(_pad_axis(w1, 0, K_pad), 1, D_pad).astype(jnp.bfloat16)
    b1p = _pad_axis(b1, 1, D_pad).astype(jnp.float32)
    w2p = _pad_axis(_pad_axis(w2, 0, D_pad), 1, N_pad).astype(jnp.bfloat16)
    b2p = _pad_axis(b2, 1, N_pad).astype(jnp.float32)
    w3p = _pad_axis(_pad_axis(w3, 0, N_pad), 1, C_pad).astype(jnp.float32)
    b3p = _pad_axis(b3, 1, C_pad).astype(jnp.float32)

    # ---- tiling --------------------------------------------------------------
    tile_b = tile_batch if tile_batch is not None else (B if B <= 8 else 8)
    assert B % tile_b == 0, "tile_batch must divide batch"
    n_bt = B // tile_b
    assert n_bt == 1 or tile_b % 8 == 0, \
        "with multiple batch tiles, tile_batch must be a multiple of 8"

    if tile_tokens is None:
        tile_tokens = num_tokens
        for cand in (1024, 512, 256, 128, 64, 32, 16, 8):
            if cand <= num_tokens and num_tokens % cand == 0:
                tile_tokens = cand
                break
    assert num_tokens % tile_tokens == 0
    assert tile_tokens % 8 == 0 or tile_tokens == num_tokens
    n_tt = num_tokens // tile_tokens
    tile_m = tile_b * tile_tokens

    # Block-diagonal 0/1 pooling matrix: pool[b, m] = 1 iff row m belongs to
    # local batch b (rows are batch-major within a tile). Scaled by 1/Np at end.
    pool = (jnp.arange(tile_m)[None, :] // tile_tokens
            == jnp.arange(tile_b)[:, None]).astype(jnp.float32)

    # ---- VMEM budget (double-buffered tiles + resident weights + headroom) --
    est = (2 * _nbytes((tile_b, tile_tokens, K_pad), jnp.bfloat16)
           + 2 * (_nbytes(w1p.shape, jnp.bfloat16)
                  + _nbytes(w2p.shape, jnp.bfloat16)
                  + _nbytes(w3p.shape, jnp.float32)
                  + _nbytes(b1p.shape, jnp.float32)
                  + _nbytes(b2p.shape, jnp.float32)
                  + _nbytes(b3p.shape, jnp.float32)
                  + _nbytes(pool.shape, jnp.float32))
           + 2 * _nbytes((tile_b, C_pad), jnp.float32)
           + _nbytes((tile_b, N_pad), jnp.float32)
           + 4 * tile_m * max(D_pad, N_pad) * 4)       # live f32 activations
    vmem_limit = int(min(max(2 * est, 16 * 1024 * 1024), 64 * 1024 * 1024))

    kernel = functools.partial(_model_entry_kernel, tile_b=tile_b,
                               tile_t=tile_tokens, inv_np=1.0 / num_tokens)

    resident = lambda shape: pl.BlockSpec(shape, lambda b, t: (0,) * len(shape))

    out = pl.pallas_call(
        kernel,
        out_shape=jax.ShapeDtypeStruct((B, C_pad), jnp.float32),
        grid=(n_bt, n_tt),
        in_specs=[
            pl.BlockSpec((tile_b, tile_tokens, K_pad), lambda b, t: (b, t, 0)),
            resident(pool.shape),
            resident(w1p.shape), resident(b1p.shape),
            resident(w2p.shape), resident(b2p.shape),
            resident(w3p.shape), resident(b3p.shape),
        ],
        out_specs=pl.BlockSpec((tile_b, C_pad), lambda b, t: (b, 0)),
        scratch_shapes=[pltpu.VMEM((tile_b, N_pad), jnp.float32)],
        compiler_params=pltpu.CompilerParams(
            dimension_semantics=("parallel", "arbitrary"),
            vmem_limit_bytes=vmem_limit),
    )(patches_p, pool, w1p, b1p, w2p, b2p, w3p, b3p)

    return out[:, :ncls]


def init_params(key, *, in_ch=4, patch=4, embed_dim=32, neck_dim=32,
                num_classes=8):
    """Deterministic synthetic parameters (shapes implied by the submodules)."""
    k1, k2, k3 = jax.random.split(key, 3)
    kdim = in_ch * patch * patch
    return {
        # backbone patch-embed conv weight [D, C, p, p] flattened to [C*p*p, D]
        "w1": 0.05 * jax.random.normal(k1, (kdim, embed_dim), jnp.float32),
        "b1": jnp.zeros((1, embed_dim), jnp.float32),
        # neck projection
        "w2": 0.05 * jax.random.normal(k2, (embed_dim, neck_dim), jnp.float32),
        "b2": jnp.zeros((1, neck_dim), jnp.float32),
        # decoder classifier head
        "w3": 0.05 * jax.random.normal(k3, (neck_dim, num_classes), jnp.float32),
        "b3": jnp.zeros((1, num_classes), jnp.float32),
    }


def _reference_forward(x, params, *, patch=4):
    """Pure-JAX f32 reference for a sanity check."""
    B, C, H, W = x.shape
    p = patch
    hp, wp = H // p, W // p
    xp = x.reshape(B, C, hp, p, wp, p).transpose(0, 2, 4, 1, 3, 5)
    patches = xp.reshape(B * hp * wp, C * p * p)
    t = jax.nn.gelu(patches @ params["w1"] + params["b1"])
    f = jnp.maximum(t @ params["w2"] + params["b2"], 0.0)
    pooled = f.reshape(B, hp * wp, -1).mean(axis=1)
    return pooled @ params["w3"] + params["b3"]


if __name__ == "__main__":
    key = jax.random.PRNGKey(0)
    kx, kp = jax.random.split(key)

    # Small shapes consistent with an NCHW image backbone.
    B, C, H, W = 2, 4, 16, 16
    x = jax.random.normal(kx, (B, C, H, W), jnp.float32)
    params = init_params(kp, in_ch=C, patch=4, embed_dim=32,
                         neck_dim=32, num_classes=8)

    # tile_tokens=8 -> 2 token tiles, exercising the accumulator / pl.when path.
    out = model_entry_forward(x, params, current_step=0, patch=4, tile_tokens=8)
    out = jax.block_until_ready(out)

    ref = _reference_forward(x, params)
    assert out.shape == (B, 8)
    assert jnp.allclose(out, ref, atol=2e-2, rtol=2e-2), "mismatch vs reference"

    print("KERNEL_OK")
</pallas_src>

<mosaic_0001>
module attributes {stable_mosaic.version = 11 : i64} {
  func.func @_model_entry_kernel(%arg0: i32, %arg1: i32, %arg2: memref<2x8x128xbf16, #tpu.memory_space<vmem>>, %arg3: memref<2x16xf32, #tpu.memory_space<vmem>>, %arg4: memref<128x128xbf16, #tpu.memory_space<vmem>>, %arg5: memref<1x128xf32, #tpu.memory_space<vmem>>, %arg6: memref<128x128xbf16, #tpu.memory_space<vmem>>, %arg7: memref<1x128xf32, #tpu.memory_space<vmem>>, %arg8: memref<128x128xf32, #tpu.memory_space<vmem>>, %arg9: memref<1x128xf32, #tpu.memory_space<vmem>>, %arg10: memref<2x128xf32, #tpu.memory_space<vmem>>, %arg11: memref<2x128xf32, #tpu.memory_space<vmem>>) attributes {dimension_semantics = [#tpu.dimension_semantics<parallel>, #tpu.dimension_semantics<arbitrary>], iteration_bounds = array<i64: 1, 2>, scalar_prefetch = 0 : i64, scratch_operands = 1 : i64, tpu.core_type = #tpu.core_type<tc>, window_params = [{transform_indices = @transform_0, window_bounds = array<i64: 2, 8, 128>}, {pipeline_mode = #tpu.pipeline_mode<synchronous>, transform_indices = @transform_1, window_bounds = array<i64: 2, 16>}, {pipeline_mode = #tpu.pipeline_mode<synchronous>, transform_indices = @transform_2, window_bounds = array<i64: 128, 128>}, {pipeline_mode = #tpu.pipeline_mode<synchronous>, transform_indices = @transform_3, window_bounds = array<i64: 1, 128>}, {pipeline_mode = #tpu.pipeline_mode<synchronous>, transform_indices = @transform_4, window_bounds = array<i64: 128, 128>}, {pipeline_mode = #tpu.pipeline_mode<synchronous>, transform_indices = @transform_5, window_bounds = array<i64: 1, 128>}, {pipeline_mode = #tpu.pipeline_mode<synchronous>, transform_indices = @transform_6, window_bounds = array<i64: 128, 128>}, {pipeline_mode = #tpu.pipeline_mode<synchronous>, transform_indices = @transform_7, window_bounds = array<i64: 1, 128>}, {transform_indices = @transform_8, window_bounds = array<i64: 2, 128>}]} {
    %c0_i32 = arith.constant 0 : i32
    %0 = arith.cmpi eq, %arg1, %c0_i32 : i32
    %1 = arith.extui %0 : i1 to i32
    %c0_i32_0 = arith.constant 0 : i32
    %2 = arith.cmpi ne, %1, %c0_i32_0 : i32
    scf.if %2 {
      %cst_25 = arith.constant 0.000000e+00 : f32
      %39 = vector.broadcast %cst_25 : f32 to vector<2x128xf32>
      %c0_26 = arith.constant 0 : index
      %c0_27 = arith.constant 0 : index
      %40 = vector.load %arg11[%c0_26, %c0_27] : memref<2x128xf32, #tpu.memory_space<vmem>>, vector<2x128xf32>
      tpu.vector_store %arg11[%c0_26, %c0_27], %39 {strides = array<i32>} : memref<2x128xf32, #tpu.memory_space<vmem>>, vector<2x128xf32>,
    } else {
    }
    %c0 = arith.constant 0 : index
    %c0_1 = arith.constant 0 : index
    %c0_2 = arith.constant 0 : index
    %3 = vector.load %arg2[%c0, %c0_1, %c0_2] : memref<2x8x128xbf16, #tpu.memory_space<vmem>>, vector<2x8x128xbf16>
    %4 = vector.shape_cast %3 : vector<2x8x128xbf16> to vector<16x128xbf16>
    %c0_3 = arith.constant 0 : index
    %c0_4 = arith.constant 0 : index
    %5 = vector.load %arg4[%c0_3, %c0_4] : memref<128x128xbf16, #tpu.memory_space<vmem>>, vector<128x128xbf16>
    %cst = arith.constant dense<0.000000e+00> : vector<16x128xf32>
    %6 = tpu.matmul %4, %5, %cst {dimension_numbers = #tpu.dot_dimension_numbers<[1], [0], [0], [1], [0, 0, 1, 1], [], []>} : vector<16x128xbf16>, vector<128x128xbf16>, vector<16x128xf32> -> vector<16x128xf32>
    %c0_5 = arith.constant 0 : index
    %c0_6 = arith.constant 0 : index
    %7 = vector.load %arg5[%c0_5, %c0_6] : memref<1x128xf32, #tpu.memory_space<vmem>>, vector<1x128xf32>
    %8 = vector.broadcast %7 : vector<1x128xf32> to vector<16x128xf32>
    %9 = arith.addf %6, %8 : vector<16x128xf32>
    %10 = arith.mulf %9, %9 : vector<16x128xf32>
    %11 = arith.mulf %9, %10 : vector<16x128xf32>
    %cst_7 = arith.constant 4.471500e-02 : f32
    %12 = vector.broadcast %cst_7 : f32 to vector<16x128xf32>
    %13 = arith.mulf %12, %11 : vector<16x128xf32>
    %14 = arith.addf %9, %13 : vector<16x128xf32>
    %cst_8 = arith.constant 0.797884583 : f32
    %15 = vector.broadcast %cst_8 : f32 to vector<16x128xf32>
    %16 = arith.mulf %15, %14 : vector<16x128xf32>
    %17 = math.tanh %16 : vector<16x128xf32>
    %cst_9 = arith.constant 1.000000e+00 : f32
    %18 = vector.broadcast %cst_9 : f32 to vector<16x128xf32>
    %19 = arith.addf %18, %17 : vector<16x128xf32>
    %cst_10 = arith.constant 5.000000e-01 : f32
    %20 = vector.broadcast %cst_10 : f32 to vector<16x128xf32>
    %21 = arith.mulf %20, %19 : vector<16x128xf32>
    %22 = arith.mulf %9, %21 : vector<16x128xf32>
    %23 = arith.truncf %22 : vector<16x128xf32> to vector<16x128xbf16>
    %c0_11 = arith.constant 0 : index
    %c0_12 = arith.constant 0 : index
    %24 = vector.load %arg6[%c0_11, %c0_12] : memref<128x128xbf16, #tpu.memory_space<vmem>>, vector<128x128xbf16>
    %cst_13 = arith.constant dense<0.000000e+00> : vector<16x128xf32>
    %25 = tpu.matmul %23, %24, %cst_13 {dimension_numbers = #tpu.dot_dimension_numbers<[1], [0], [0], [1], [0, 0, 1, 1], [], []>} : vector<16x128xbf16>, vector<128x128xbf16>, vector<16x128xf32> -> vector<16x128xf32>
    %c0_14 = arith.constant 0 : index
    %c0_15 = arith.constant 0 : index
    %26 = vector.load %arg7[%c0_14, %c0_15] : memref<1x128xf32, #tpu.memory_space<vmem>>, vector<1x128xf32>
    %27 = vector.broadcast %26 : vector<1x128xf32> to vector<16x128xf32>
    %28 = arith.addf %25, %27 : vector<16x128xf32>
    %cst_16 = arith.constant 0.000000e+00 : f32
    %29 = vector.broadcast %cst_16 : f32 to vector<16x128xf32>
    %30 = arith.maximumf %28, %29 : vector<16x128xf32>
    %c0_17 = arith.constant 0 : index
    %c0_18 = arith.constant 0 : index
    %31 = vector.load %arg11[%c0_17, %c0_18] : memref<2x128xf32, #tpu.memory_space<vmem>>, vector<2x128xf32>
    %c0_19 = arith.constant 0 : index
    %c0_20 = arith.constant 0 : index
    %32 = vector.load %arg3[%c0_19, %c0_20] : memref<2x16xf32, #tpu.memory_space<vmem>>, vector<2x16xf32>
    %cst_21 = arith.constant dense<0.000000e+00> : vector<2x128xf32>
    %33 = tpu.matmul %32, %30, %cst_21 {dimension_numbers = #tpu.dot_dimension_numbers<[1], [0], [0], [1], [0, 0, 1, 1], [], []>} : vector<2x16xf32>, vector<16x128xf32>, vector<2x128xf32> -> vector<2x128xf32>
    %34 = arith.addf %31, %33 : vector<2x128xf32>
    %c0_22 = arith.constant 0 : index
    %c0_23 = arith.constant 0 : index
    %35 = vector.load %arg11[%c0_22, %c0_23] : memref<2x128xf32, #tpu.memory_space<vmem>>, vector<2x128xf32>
    tpu.vector_store %arg11[%c0_22, %c0_23], %34 {strides = array<i32>} : memref<2x128xf32, #tpu.memory_space<vmem>>, vector<2x128xf32>,
    %c1_i32 = arith.constant 1 : i32
    %36 = arith.cmpi eq, %arg1, %c1_i32 : i32
    %37 = arith.extui %36 : i1 to i32
    %c0_i32_24 = arith.constant 0 : i32
    %38 = arith.cmpi ne, %37, %c0_i32_24 : i32
    scf.if %38 {
      %c0_25 = arith.constant 0 : index
      %c0_26 = arith.constant 0 : index
      %39 = vector.load %arg11[%c0_25, %c0_26] : memref<2x128xf32, #tpu.memory_space<vmem>>, vector<2x128xf32>
      %cst_27 = arith.constant 6.250000e-02 : f32
      %40 = vector.broadcast %cst_27 : f32 to vector<2x128xf32>
      %41 = arith.mulf %39, %40 : vector<2x128xf32>
      %c0_28 = arith.constant 0 : index
      %c0_29 = arith.constant 0 : index
      %42 = vector.load %arg8[%c0_28, %c0_29] : memref<128x128xf32, #tpu.memory_space<vmem>>, vector<128x128xf32>
      %cst_30 = arith.constant dense<0.000000e+00> : vector<2x128xf32>
      %43 = tpu.matmul %41, %42, %cst_30 {dimension_numbers = #tpu.dot_dimension_numbers<[1], [0], [0], [1], [0, 0, 1, 1], [], []>} : vector<2x128xf32>, vector<128x128xf32>, vector<2x128xf32> -> vector<2x128xf32>
      %c0_31 = arith.constant 0 : index
      %c0_32 = arith.constant 0 : index
      %44 = vector.load %arg9[%c0_31, %c0_32] : memref<1x128xf32, #tpu.memory_space<vmem>>, vector<1x128xf32>
      %45 = vector.broadcast %44 : vector<1x128xf32> to vector<2x128xf32>
      %46 = arith.addf %43, %45 : vector<2x128xf32>
      %c0_33 = arith.constant 0 : index
      %c0_34 = arith.constant 0 : index
      %47 = vector.load %arg10[%c0_33, %c0_34] : memref<2x128xf32, #tpu.memory_space<vmem>>, vector<2x128xf32>
      tpu.vector_store %arg10[%c0_33, %c0_34], %46 {strides = array<i32>} : memref<2x128xf32, #tpu.memory_space<vmem>>, vector<2x128xf32>,
    } else {
    }
    return
  }
  func.func @transform_0(%arg0: i32, %arg1: i32) -> (i32, i32, i32) {
    %c0_i32 = arith.constant 0 : i32
    %c0_i32_0 = arith.constant 0 : i32
    return %arg0, %arg1, %c0_i32 : i32, i32, i32
  }
  func.func @transform_1(%arg0: i32, %arg1: i32) -> (i32, i32) {
    %c0_i32 = arith.constant 0 : i32
    %c0_i32_0 = arith.constant 0 : i32
    %c0_i32_1 = arith.constant 0 : i32
    return %c0_i32, %c0_i32_0 : i32, i32
  }
  func.func @transform_2(%arg0: i32, %arg1: i32) -> (i32, i32) {
    %c0_i32 = arith.constant 0 : i32
    %c0_i32_0 = arith.constant 0 : i32
    %c0_i32_1 = arith.constant 0 : i32
    return %c0_i32, %c0_i32_0 : i32, i32
  }
  func.func @transform_3(%arg0: i32, %arg1: i32) -> (i32, i32) {
    %c0_i32 = arith.constant 0 : i32
    %c0_i32_0 = arith.constant 0 : i32
    %c0_i32_1 = arith.constant 0 : i32
    return %c0_i32, %c0_i32_0 : i32, i32
  }
  func.func @transform_4(%arg0: i32, %arg1: i32) -> (i32, i32) {
    %c0_i32 = arith.constant 0 : i32
    %c0_i32_0 = arith.constant 0 : i32
    %c0_i32_1 = arith.constant 0 : i32
    return %c0_i32, %c0_i32_0 : i32, i32
  }
  func.func @transform_5(%arg0: i32, %arg1: i32) -> (i32, i32) {
    %c0_i32 = arith.constant 0 : i32
    %c0_i32_0 = arith.constant 0 : i32
    %c0_i32_1 = arith.constant 0 : i32
    return %c0_i32, %c0_i32_0 : i32, i32
  }
  func.func @transform_6(%arg0: i32, %arg1: i32) -> (i32, i32) {
    %c0_i32 = arith.constant 0 : i32
    %c0_i32_0 = arith.constant 0 : i32
    %c0_i32_1 = arith.constant 0 : i32
    return %c0_i32, %c0_i32_0 : i32, i32
  }
  func.func @transform_7(%arg0: i32, %arg1: i32) -> (i32, i32) {
    %c0_i32 = arith.constant 0 : i32
    %c0_i32_0 = arith.constant 0 : i32
    %c0_i32_1 = arith.constant 0 : i32
    return %c0_i32, %c0_i32_0 : i32, i32
  }
  func.func @transform_8(%arg0: i32, %arg1: i32) -> (i32, i32) {
    %c0_i32 = arith.constant 0 : i32
    %c0_i32_0 = arith.constant 0 : i32
    return %arg0, %c0_i32 : i32, i32
  }
}

</mosaic_0001>

<llo_original>
// kernel: tpu_custom_call.1
$region0: #{tpu_custom_call.1}
  #allocation0 [shape = 'u32[]', space=smem, size = 0x4, offset = 0x4, fixed_abs, tag = 'smem constant byte address 0x4 - core index']
  #allocation1 [shape = 'u32[144,128]{1,0:T(1,128)}', space=vmem, size = 0x12000, scoped, tag = 'internal scratch']
  #allocation2 [shape = 'f32[2,128]{1,0:T(2,128)}', space=vmem, size = 0x400, scoped, tag = 'scratch operand']
  %s0 = inlined_call_operand.hbm [shape: bf16[2,16,128], index: 0, kind: input, shape index: {}]
  %s1 = inlined_call_operand.vmem [shape: f32[2,16], index: 1, kind: input, shape index: {}]
  %s2 = inlined_call_operand.hbm [shape: bf16[128,128], index: 2, kind: input, shape index: {}]
  %s3 = inlined_call_operand.vmem [shape: f32[1,128], index: 3, kind: input, shape index: {}]
  %s4 = inlined_call_operand.hbm [shape: bf16[128,128], index: 4, kind: input, shape index: {}]
  %s5 = inlined_call_operand.vmem [shape: f32[1,128], index: 5, kind: input, shape index: {}]
  %s6 = inlined_call_operand.hbm [shape: f32[128,128], index: 6, kind: input, shape index: {}]
  %s7 = inlined_call_operand.vmem [shape: f32[1,128], index: 7, kind: input, shape index: {}]
  %s8 = inlined_call_operand.hbm [shape: f32[2,128], index: 8, kind: output, shape index: {}]
  %s9 = sld [smem:[#allocation0]]
  $region89: #{tpu_custom_call.1} parent=0
    _
  %s11 = ssub.s32 1, %s9
  %s12 = scalar_select 0, %s11, %s9
  $region1: #{tpu_custom_call.1} parent=0
    #allocation3 [shape = 'u8[8192]{0}', space=vmem, size = 0x2000, scoped, tag = 'input window, operand 0']
    #allocation4 [shape = 's32[2]{0}', space=sflag, size = 0x8, scoped, tag = 'scoped memory for tpu_custom_call.1']
    #allocation5 [shape = 's32[2]{0}', space=sflag, size = 0x8, scoped, tag = 'scoped memory for tpu_custom_call.1']
    #allocation6 [shape = 'u8[32768]{0}', space=vmem, size = 0x8000, scoped, tag = 'input window, operand 2, single buffered']
    #allocation7 [shape = 's32[1]{0}', space=sflag, size = 0x4, scoped, tag = 'scoped memory for tpu_custom_call.1']
    #allocation8 [shape = 'u8[32768]{0}', space=vmem, size = 0x8000, scoped, tag = 'input window, operand 4, single buffered']
    #allocation9 [shape = 'u8[65536]{0}', space=vmem, size = 0x10000, scoped, tag = 'input window, operand 6, single buffered']
    #allocation10 [shape = 's32[1]{0}', space=sflag, size = 0x4, scoped, tag = 'scoped memory for tpu_custom_call.1']
    #allocation11 [shape = 'u8[1024]{0}', space=vmem, size = 0x400, scoped, tag = 'output window, operand 0, single buffered']
    %13 = vsyncpa [#allocation4], 0
    %s14 = scalar_lea.sflag [#allocation4], 1
    %15 = vsyncpa %s14, 0
    %16 = vsyncpa [#allocation7], 0
    %17 = vsyncpa [#allocation10], 0
    %18 = vsyncpa [#allocation5], 0
    loop: start=0, step=1, limit=4
    $region2: #{tpu_custom_call.1} parent=1 // loop_pre_header
      _
    $region3: #{tpu_custom_call.1} parent=1 // loop_header
      %s20 = sphi 0, %s24
      %p21 = scmp.ge.s32.totalorder %s20, 4
      %s27 = sphi 0, %s39
      %s28 = sphi 0, %s35
      %s29 = sphi 0, %s27
      %s30 = sphi 0, %s28
      %s31 = sphi 0, %s29
      %s32 = sphi 0, %s30
      %s44 = sphi 0, %s46
      %s47 = sphi 0, %s44
      %s48 = sphi 0, %s47
      %s64 = sphi 0, %s48
      %s68 = sphi 0, %s68
      %s70 = sphi 0, %s68
      %s71 = sphi 0, %s70
      %s85 = sphi 0, %s71
      %s89 = sphi 0, %s89
      %s91 = sphi 0, %s89
      %s92 = sphi 0, %s91
      %s106 = sphi 0, %s92
      %s110 = sphi 0, %s110
      %s112 = sphi 0, %s110
      %s113 = sphi 0, %s112
      %s127 = sphi 0, %s113
      %s131 = sphi 0, %s131
      %s133 = sphi 0, %s131
      %s134 = sphi 0, %s133
      %s148 = sphi 0, %s134
      %s152 = sphi 0, %s152
      %s154 = sphi 0, %s152
      %s155 = sphi 0, %s154
      %s169 = sphi 0, %s155
      %s173 = sphi 0, %s173
      %s175 = sphi 0, %s173
      %s176 = sphi 0, %s175
      %s190 = sphi 0, %s176
      %s194 = sphi 0, %s194
      %s196 = sphi 0, %s194
      %s197 = sphi 0, %s196
      %s211 = sphi 0, %s197
      %s217 = sphi 0, %s219
      %s220 = sphi 0, %s217
      %s221 = sphi 0, %s220
      %s237 = sphi 0, %s221
    $region4: #{tpu_custom_call.1} parent=1 // loop_header_branch
      %23 = sbr.rel (%p21) target = $region8
    $region5: #{tpu_custom_call.1} parent=1 // loop_body
      %s25 = ssub.s32 %s20, 1
      %s26 = ssub.s32 %s20, 2
      %s33 = sadd.s32 1, %s28
      %p34 = scmp.ge.s32.totalorder %s33, 2
      %s35 = scalar_select %p34, 0, %s33
      %s36 = sadd.s32 1, %s27
      %s37 = scalar_select %p34, %s36, %s27
      %p38 = scmp.ge.s32.totalorder %s37, 1
      %s39 = scalar_select %p38, 0, %s37
      %s40 = ssub.s32 %s27, %s39
      %s41 = ssub.s32 %s28, %s35
      %s42 = sor.u32 %s40, %s41
      %p43 = scmp.eq.s32.totalorder %s42, 0
      %s45 = sadd.s32 %s44, 1
      %s46 = scalar_select %p43, %s44, %s45
      %p49 = pneg %p43
      %p50 = scmp.eq.s32.totalorder %s20, 1
      %p51 = por %p49, %p50
      %p52 = scmp.ne.s32.totalorder %s44, %s47
      %p53 = scmp.eq.s32.totalorder %s20, 0
      %p54 = por %p52, %p53
      %p55 = scmp.ne.s32.totalorder %s44, %s47
      %p56 = scmp.eq.s32.totalorder %s25, 1
      %p57 = por %p55, %p56
      %p58 = scmp.ne.s32.totalorder %s47, %s48
      %p59 = scmp.eq.s32.totalorder %s25, 0
      %p60 = por %p58, %p59
      %p61 = scmp.ne.s32.totalorder %s47, %s48
      %p62 = scmp.eq.s32.totalorder %s26, 1
      %p63 = por %p61, %p62
      %p65 = scmp.ne.s32.totalorder %s48, %s64
      %p66 = scmp.eq.s32.totalorder %s26, 0
      %p67 = por %p65, %p66
      %s69 = sadd.s32 %s68, 1
      %p72 = scmp.eq.s32.totalorder %s20, 1
      %p73 = scmp.ne.s32.totalorder %s68, %s70
      %p74 = scmp.eq.s32.totalorder %s20, 0
      %p75 = por %p73, %p74
      %p76 = scmp.ne.s32.totalorder %s68, %s70
      %p77 = scmp.eq.s32.totalorder %s25, 1
      %p78 = por %p76, %p77
      %p79 = scmp.ne.s32.totalorder %s70, %s71
      %p80 = scmp.eq.s32.totalorder %s25, 0
      %p81 = por %p79, %p80
      %p82 = scmp.ne.s32.totalorder %s70, %s71
      %p83 = scmp.eq.s32.totalorder %s26, 1
      %p84 = por %p82, %p83
      %p86 = scmp.ne.s32.totalorder %s71, %s85
      %p87 = scmp.eq.s32.totalorder %s26, 0
      %p88 = por %p86, %p87
      %s90 = sadd.s32 %s89, 1
      %p93 = scmp.eq.s32.totalorder %s20, 1
      %p94 = scmp.ne.s32.totalorder %s89, %s91
      %p95 = scmp.eq.s32.totalorder %s20, 0
      %p96 = por %p94, %p95
      %p97 = scmp.ne.s32.totalorder %s89, %s91
      %p98 = scmp.eq.s32.totalorder %s25, 1
      %p99 = por %p97, %p98
      %p100 = scmp.ne.s32.totalorder %s91, %s92
      %p101 = scmp.eq.s32.totalorder %s25, 0
      %p102 = por %p100, %p101
      %p103 = scmp.ne.s32.totalorder %s91, %s92
      %p104 = scmp.eq.s32.totalorder %s26, 1
      %p105 = por %p103, %p104
      %p107 = scmp.ne.s32.totalorder %s92, %s106
      %p108 = scmp.eq.s32.totalorder %s26, 0
      %p109 = por %p107, %p108
      %s111 = sadd.s32 %s110, 1
      %p114 = scmp.eq.s32.totalorder %s20, 1
      %p115 = scmp.ne.s32.totalorder %s110, %s112
      %p116 = scmp.eq.s32.totalorder %s20, 0
      %p117 = por %p115, %p116
      %p118 = scmp.ne.s32.totalorder %s110, %s112
      %p119 = scmp.eq.s32.totalorder %s25, 1
      %p120 = por %p118, %p119
      %p121 = scmp.ne.s32.totalorder %s112, %s113
      %p122 = scmp.eq.s32.totalorder %s25, 0
      %p123 = por %p121, %p122
      %p124 = scmp.ne.s32.totalorder %s112, %s113
      %p125 = scmp.eq.s32.totalorder %s26, 1
      %p126 = por %p124, %p125
      %p128 = scmp.ne.s32.totalorder %s113, %s127
      %p129 = scmp.eq.s32.totalorder %s26, 0
      %p130 = por %p128, %p129
      %s132 = sadd.s32 %s131, 1
      %p135 = scmp.eq.s32.totalorder %s20, 1
      %p136 = scmp.ne.s32.totalorder %s131, %s133
      %p137 = scmp.eq.s32.totalorder %s20, 0
      %p138 = por %p136, %p137
      %p139 = scmp.ne.s32.totalorder %s131, %s133
      %p140 = scmp.eq.s32.totalorder %s25, 1
      %p141 = por %p139, %p140
      %p142 = scmp.ne.s32.totalorder %s133, %s134
      %p143 = scmp.eq.s32.totalorder %s25, 0
      %p144 = por %p142, %p143
      %p145 = scmp.ne.s32.totalorder %s133, %s134
      %p146 = scmp.eq.s32.totalorder %s26, 1
      %p147 = por %p145, %p146
      %p149 = scmp.ne.s32.totalorder %s134, %s148
      %p150 = scmp.eq.s32.totalorder %s26, 0
      %p151 = por %p149, %p150
      %s153 = sadd.s32 %s152, 1
      %p156 = scmp.eq.s32.totalorder %s20, 1
      %p157 = scmp.ne.s32.totalorder %s152, %s154
      %p158 = scmp.eq.s32.totalorder %s20, 0
      %p159 = por %p157, %p158
      %p160 = scmp.ne.s32.totalorder %s152, %s154
      %p161 = scmp.eq.s32.totalorder %s25, 1
      %p162 = por %p160, %p161
      %p163 = scmp.ne.s32.totalorder %s154, %s155
      %p164 = scmp.eq.s32.totalorder %s25, 0
      %p165 = por %p163, %p164
      %p166 = scmp.ne.s32.totalorder %s154, %s155
      %p167 = scmp.eq.s32.totalorder %s26, 1
      %p168 = por %p166, %p167
      %p170 = scmp.ne.s32.totalorder %s155, %s169
      %p171 = scmp.eq.s32.totalorder %s26, 0
      %p172 = por %p170, %p171
      %s174 = sadd.s32 %s173, 1
      %p177 = scmp.eq.s32.totalorder %s20, 1
      %p178 = scmp.ne.s32.totalorder %s173, %s175
      %p179 = scmp.eq.s32.totalorder %s20, 0
      %p180 = por %p178, %p179
      %p181 = scmp.ne.s32.totalorder %s173, %s175
      %p182 = scmp.eq.s32.totalorder %s25, 1
      %p183 = por %p181, %p182
      %p184 = scmp.ne.s32.totalorder %s175, %s176
      %p185 = scmp.eq.s32.totalorder %s25, 0
      %p186 = por %p184, %p185
      %p187 = scmp.ne.s32.totalorder %s175, %s176
      %p188 = scmp.eq.s32.totalorder %s26, 1
      %p189 = por %p187, %p188
      %p191 = scmp.ne.s32.totalorder %s176, %s190
      %p192 = scmp.eq.s32.totalorder %s26, 0
      %p193 = por %p191, %p192
      %s195 = sadd.s32 %s194, 1
      %p198 = scmp.eq.s32.totalorder %s20, 1
      %p199 = scmp.ne.s32.totalorder %s194, %s196
      %p200 = scmp.eq.s32.totalorder %s20, 0
      %p201 = por %p199, %p200
      %p202 = scmp.ne.s32.totalorder %s194, %s196
      %p203 = scmp.eq.s32.totalorder %s25, 1
      %p204 = por %p202, %p203
      %p205 = scmp.ne.s32.totalorder %s196, %s197
      %p206 = scmp.eq.s32.totalorder %s25, 0
      %p207 = por %p205, %p206
      %p208 = scmp.ne.s32.totalorder %s196, %s197
      %p209 = scmp.eq.s32.totalorder %s26, 1
      %p210 = por %p208, %p209
      %p212 = scmp.ne.s32.totalorder %s197, %s211
      %p213 = scmp.eq.s32.totalorder %s26, 0
      %p214 = por %p212, %p213
      %s215 = ssub.s32 %s27, %s39
      %p216 = scmp.eq.s32.totalorder %s215, 0
      %s218 = sadd.s32 %s217, 1
      %s219 = scalar_select %p216, %s217, %s218
      %p222 = pneg %p216
      %p223 = scmp.eq.s32.totalorder %s20, 1
      %p224 = por %p222, %p223
      %p225 = scmp.ne.s32.totalorder %s217, %s220
      %p226 = scmp.eq.s32.totalorder %s20, 0
      %p227 = por %p225, %p226
      %p228 = scmp.ne.s32.totalorder %s217, %s220
      %p229 = scmp.eq.s32.totalorder %s25, 1
      %p230 = por %p228, %p229
      %p231 = scmp.ne.s32.totalorder %s220, %s221
      %p232 = scmp.eq.s32.totalorder %s25, 0
      %p233 = por %p231, %p232
      %p234 = scmp.ne.s32.totalorder %s220, %s221
      %p235 = scmp.eq.s32.totalorder %s26, 1
      %p236 = por %p234, %p235
      %p238 = scmp.ne.s32.totalorder %s221, %s237
      %p239 = scmp.eq.s32.totalorder %s26, 0
      %p240 = por %p238, %p239
      %p241 = scmp.le.s32.totalorder 1, %s20
      %p242 = scmp.lt.s32.totalorder %s20, 3
      %p243 = pnand %p241, %p242
      %p244 = pneg %p243
      // Predicated region
      $region9: #{tpu_custom_call.1} parent=5 // pred_check
        _
      $region10: #{tpu_custom_call.1} parent=5 // pred_check_branch
        %246 = sbr.rel (%p243) target = $region12
      $region11: #{tpu_custom_call.1} parent=5 // pred_region
        %s247 = ssub.s32 %s20, 1
        // Predicated region
        $region13: #{tpu_custom_call.1} parent=11 // pred_check
          %p248 = pneg %p81
        $region14: #{tpu_custom_call.1} parent=11 // pred_check_branch
          %250 = sbr.rel (%p248) target = $region16
        $region15: #{tpu_custom_call.1} parent=11 // pred_region
          _
        $region16: #{tpu_custom_call.1} parent=11 // pred_fallthru
          _
        // Predicated region
        $region17: #{tpu_custom_call.1} parent=11 // pred_check
          %p251 = pneg %p102
        $region18: #{tpu_custom_call.1} parent=11 // pred_check_branch
          %253 = sbr.rel (%p251) target = $region20
        $region19: #{tpu_custom_call.1} parent=11 // pred_region
          %s255 = ssub.s32 1024, 1024
          %256 = vsyncadd [#allocation7], %s255
          %s257 = sshll.u32 [#allocation6], 4
          %s258 = int_to_ptr.vmem [resolvable:$true] %s257
          %263 = dma.hbm_to_vmem [thread:$0]  %s2, 1024, %s258, [#allocation7], 64, 64, 4
        $region20: #{tpu_custom_call.1} parent=11 // pred_fallthru
          _
        // Predicated region
        $region21: #{tpu_custom_call.1} parent=11 // pred_check
          %p264 = pneg %p123
        $region22: #{tpu_custom_call.1} parent=11 // pred_check_branch
          %266 = sbr.rel (%p264) target = $region24
        $region23: #{tpu_custom_call.1} parent=11 // pred_region
          _
        $region24: #{tpu_custom_call.1} parent=11 // pred_fallthru
          _
        // Predicated region
        $region25: #{tpu_custom_call.1} parent=11 // pred_check
          %p267 = pneg %p144
        $region26: #{tpu_custom_call.1} parent=11 // pred_check_branch
          %269 = sbr.rel (%p267) target = $region28
        $region27: #{tpu_custom_call.1} parent=11 // pred_region
          %s271 = ssub.s32 1024, 1024
          %272 = vsyncadd [#allocation7], %s271
          %s273 = sshll.u32 [#allocation8], 4
          %s274 = int_to_ptr.vmem [resolvable:$true] %s273
          %279 = dma.hbm_to_vmem [thread:$0]  %s4, 1024, %s274, [#allocation7], 64, 64, 4
        $region28: #{tpu_custom_call.1} parent=11 // pred_fallthru
          _
        // Predicated region
        $region29: #{tpu_custom_call.1} parent=11 // pred_check
          %p280 = pneg %p165
        $region30: #{tpu_custom_call.1} parent=11 // pred_check_branch
          %282 = sbr.rel (%p280) target = $region32
        $region31: #{tpu_custom_call.1} parent=11 // pred_region
          _
        $region32: #{tpu_custom_call.1} parent=11 // pred_fallthru
          _
        // Predicated region
        $region33: #{tpu_custom_call.1} parent=11 // pred_check
          %p283 = pneg %p186
        $region34: #{tpu_custom_call.1} parent=11 // pred_check_branch
          %285 = sbr.rel (%p283) target = $region36
        $region35: #{tpu_custom_call.1} parent=11 // pred_region
          %s287 = ssub.s32 2048, 2048
          %288 = vsyncadd [#allocation10], %s287
          %s289 = sshll.u32 [#allocation9], 4
          %s290 = int_to_ptr.vmem [resolvable:$true] %s289
          %295 = dma.hbm_to_vmem [thread:$0]  %s6, 2048, %s290, [#allocation10], 128, 128, 8
        $region36: #{tpu_custom_call.1} parent=11 // pred_fallthru
          _
        // Predicated region
        $region37: #{tpu_custom_call.1} parent=11 // pred_check
          %p296 = pneg %p207
        $region38: #{tpu_custom_call.1} parent=11 // pred_check_branch
          %298 = sbr.rel (%p296) target = $region40
        $region39: #{tpu_custom_call.1} parent=11 // pred_region
          _
        $region40: #{tpu_custom_call.1} parent=11 // pred_fallthru
          _
      $region12: #{tpu_custom_call.1} parent=5 // pred_fallthru
        _
      %p299 = scmp.lt.s32.totalorder %s20, 2
      // Predicated region
      $region41: #{tpu_custom_call.1} parent=5 // pred_check
        %p300 = pneg %p299
      $region42: #{tpu_custom_call.1} parent=5 // pred_check_branch
        %302 = sbr.rel (%p300) target = $region44
      $region43: #{tpu_custom_call.1} parent=5 // pred_region
        // Predicated region
        $region45: #{tpu_custom_call.1} parent=43 // pred_check
          %p303 = pneg %p54
        $region46: #{tpu_custom_call.1} parent=43 // pred_check_branch
          %305 = sbr.rel (%p303) target = $region48
        $region47: #{tpu_custom_call.1} parent=43 // pred_region
          %s306 = sand.u32 %s44, 1
          %s307 = scalar_lea.sflag [#allocation4], %s306
          %s308 = sand.u32 %s44, 1
          %s309 = smul.addr %s308, 8
          %s310 = scalar_lea.vmem [#allocation3], %s309
          %s311 = smul.u32 2, %s27
          %s313 = ssub.s32 128, 128
          %314 = vsyncadd %s307, %s313
          %s315 = smul.addr %s311, 2
          %s316 = sadd.s32 %s28, %s315
          %s317 = smul.addr %s316, 64
          %s318 = scalar_lea.hbm %s0, %s317
          %s319 = sshll.u32 %s310, 4
          %s320 = int_to_ptr.vmem [resolvable:$true] %s319
          %325 = dma.hbm_to_vmem [thread:$0]  %s318, 128, %s320, %s307, 128, 64, 4
        $region48: #{tpu_custom_call.1} parent=43 // pred_fallthru
          _
      $region44: #{tpu_custom_call.1} parent=5 // pred_fallthru
        _
      %p326 = scmp.le.s32.totalorder 1, %s20
      %p327 = scmp.lt.s32.totalorder %s20, 3
      %p328 = pnand %p326, %p327
      %p329 = pneg %p328
      // Predicated region
      $region49: #{tpu_custom_call.1} parent=5 // pred_check
        _
      $region50: #{tpu_custom_call.1} parent=5 // pred_check_branch
        %331 = sbr.rel (%p328) target = $region52
      $region51: #{tpu_custom_call.1} parent=5 // pred_region
        %s332 = ssub.s32 %s20, 1
        %s333 = sand.u32 %s47, 1
        %s334 = scalar_lea.sflag [#allocation4], %s333
        %s335 = sand.u32 %s47, 1
        %s336 = smul.addr %s335, 8
        %s337 = scalar_lea.vmem [#allocation3], %s336
        // Predicated region
        $region53: #{tpu_custom_call.1} parent=51 // pred_check
          %p338 = pneg %p60
        $region54: #{tpu_custom_call.1} parent=51 // pred_check_branch
          %340 = sbr.rel (%p338) target = $region56
        $region55: #{tpu_custom_call.1} parent=51 // pred_region
          %341 = dma.done %s334, 128
        $region56: #{tpu_custom_call.1} parent=51 // pred_fallthru
          _
        // Predicated region
        $region57: #{tpu_custom_call.1} parent=51 // pred_check
          %p342 = pneg %p102
        $region58: #{tpu_custom_call.1} parent=51 // pred_check_branch
          %344 = sbr.rel (%p342) target = $region60
        $region59: #{tpu_custom_call.1} parent=51 // pred_region
          %345 = dma.done [#allocation7], 1024
        $region60: #{tpu_custom_call.1} parent=51 // pred_fallthru
          _
        // Predicated region
        $region61: #{tpu_custom_call.1} parent=51 // pred_check
          %p346 = pneg %p144
        $region62: #{tpu_custom_call.1} parent=51 // pred_check_branch
          %348 = sbr.rel (%p346) target = $region64
        $region63: #{tpu_custom_call.1} parent=51 // pred_region
          %349 = dma.done [#allocation7], 1024
        $region64: #{tpu_custom_call.1} parent=51 // pred_fallthru
          _
        // Predicated region
        $region65: #{tpu_custom_call.1} parent=51 // pred_check
          %p350 = pneg %p186
        $region66: #{tpu_custom_call.1} parent=51 // pred_check_branch
          %352 = sbr.rel (%p350) target = $region68
        $region67: #{tpu_custom_call.1} parent=51 // pred_region
          %353 = dma.done [#allocation10], 2048
        $region68: #{tpu_custom_call.1} parent=51 // pred_fallthru
          _
        %s354 = sand.u32 %s47, 1
        %s355 = scalar_lea.sflag [#allocation4], %s354
        %s356 = sand.u32 %s47, 1
        %s357 = smul.addr %s356, 8
        %s358 = scalar_lea.vmem [#allocation3], %s357
        %p359 = pneg %p60
        %p360 = pneg %p57
        %p361 = pneg %p81
        %p362 = pneg %p78
        %p363 = pneg %p102
        %p364 = pneg %p99
        %p365 = pneg %p123
        %p366 = pneg %p120
        %p367 = pneg %p144
        %p368 = pneg %p141
        %p369 = pneg %p165
        %p370 = pneg %p162
        %p371 = pneg %p186
        %p372 = pneg %p183
        %p373 = pneg %p207
        %p374 = pneg %p204
        %p375 = pneg %p233
        %p376 = pneg %p230
        %s377 = smul.u32 2, %s29
        %p379 = scmp.eq.s32.totalorder %s30, 0
        // Predicated region
        $region69: #{tpu_custom_call.1} parent=51 // pred_check
          %p380 = pneg %p379
        $region70: #{tpu_custom_call.1} parent=51 // pred_check_branch
          %382 = sbr.rel (%p380) target = $region72
        $region71: #{tpu_custom_call.1} parent=51 // pred_region
          %383 = vst [vmem:[#allocation2] sm:$0x3] 0.0
        $region72: #{tpu_custom_call.1} parent=51 // pred_fallthru
          _
        %v384 = vld [vmem:[%s337] sm:$0xf]
        %v385 = vld [vmem:[%s337 + $0x4] sm:$0xf]
        %v386 = vld [vmem:[#allocation6] sm:$0xf]
        %v387 = vld [vmem:[#allocation6 + $0x4] sm:$0xf]
        %v388 = vld [vmem:[#allocation6 + $0x8] sm:$0xf]
        %v389 = vld [vmem:[#allocation6 + $0xc] sm:$0xf]
        %v390 = vld [vmem:[#allocation6 + $0x10] sm:$0xf]
        %v391 = vld [vmem:[#allocation6 + $0x14] sm:$0xf]
        %v392 = vld [vmem:[#allocation6 + $0x18] sm:$0xf]
        %v393 = vld [vmem:[#allocation6 + $0x1c] sm:$0xf]
        %v394 = vld [vmem:[#allocation6 + $0x20] sm:$0xf]
        %v395 = vld [vmem:[#allocation6 + $0x24] sm:$0xf]
        %v396 = vld [vmem:[#allocation6 + $0x28] sm:$0xf]
        %v397 = vld [vmem:[#allocation6 + $0x2c] sm:$0xf]
        %v398 = vld [vmem:[#allocation6 + $0x30] sm:$0xf]
        %v399 = vld [vmem:[#allocation6 + $0x34] sm:$0xf]
        %v400 = vld [vmem:[#allocation6 + $0x38] sm:$0xf]
        %v401 = vld [vmem:[#allocation6 + $0x3c] sm:$0xf]
        %v402 = vld [vmem:[%s3] sm:$0x1]
        %v404 = vlaneseq
        %v405 = vshrl.u32 %v404, 7
        %v406 = vsub.s32 0, %v405
        %v407 = vrot.slane %v402, %v406
        %v411 = vunpack.c.l.b16 %v384
        %v412 = vunpack.c.l.b16 %v385
        %v413 = vpack.c.b16 %v412, %v411
        %v431 = vunpack.c.l.b16 %v386
        %v432 = vunpack.c.l.b16 %v387
        %v433 = vunpack.c.l.b16 %v388
        %v434 = vunpack.c.l.b16 %v389
        %v435 = vunpack.c.l.b16 %v390
        %v436 = vunpack.c.l.b16 %v391
        %v437 = vunpack.c.l.b16 %v392
        %v438 = vunpack.c.l.b16 %v393
        %v439 = vunpack.c.l.b16 %v394
        %v440 = vunpack.c.l.b16 %v395
        %v441 = vunpack.c.l.b16 %v396
        %v442 = vunpack.c.l.b16 %v397
        %v443 = vunpack.c.l.b16 %v398
        %v444 = vunpack.c.l.b16 %v399
        %v445 = vunpack.c.l.b16 %v400
        %v446 = vunpack.c.l.b16 %v401
        %v447 = vpack.c.b16 %v432, %v431
        %v448 = vpack.c.b16 %v434, %v433
        %v449 = vpack.c.b16 %v436, %v435
        %v450 = vpack.c.b16 %v438, %v437
        %v451 = vpack.c.b16 %v440, %v439
        %v452 = vpack.c.b16 %v442, %v441
        %v453 = vpack.c.b16 %v444, %v443
        %v454 = vpack.c.b16 %v446, %v445
        %463 = vmatprep.subr.bf16.mxu0 0
        %464 = vmatpush1.bf16.msra.mxu0 %v447
        %465 = vmatprep.subr.bf16.mxu0 0
        %466 = vmatpush1.bf16.msra.mxu0 %v448
        %467 = vmatprep.subr.bf16.mxu0 0
        %468 = vmatpush1.bf16.msra.mxu0 %v449
        %469 = vmatprep.subr.bf16.mxu0 0
        %470 = vmatpush1.bf16.msra.mxu0 %v450
        %471 = vmatprep.subr.bf16.mxu0 0
        %472 = vmatpush1.bf16.msra.mxu0 %v451
        %473 = vmatprep.subr.bf16.mxu0 0
        %474 = vmatpush1.bf16.msra.mxu0 %v452
        %475 = vmatprep.subr.bf16.mxu0 0
        %476 = vmatpush1.bf16.msra.mxu0 %v453
        %477 = vmatprep.subr.bf16.mxu0 0
        %478 = vmatpush1.bf16.msra.mxu0 %v454
        %479 = vmatprep.subr.bf16.mxu0 0
        %480 = vmatpush1.bf16.msra.mxu0 0
        %481 = vmatprep.subr.bf16.mxu0 0
        %482 = vmatpush1.bf16.msra.mxu0 0
        %483 = vmatprep.subr.bf16.mxu0 0
        %484 = vmatpush1.bf16.msra.mxu0 0
        %485 = vmatprep.subr.bf16.mxu0 0
        %486 = vmatpush1.bf16.msra.mxu0 0
        %487 = vmatprep.subr.bf16.mxu0 0
        %488 = vmatpush1.bf16.msra.mxu0 0
        %489 = vmatprep.subr.bf16.mxu0 0
        %490 = vmatpush1.bf16.msra.mxu0 0
        %491 = vmatprep.subr.bf16.mxu0 0
        %492 = vmatpush1.bf16.msra.mxu0 0
        %493 = vmatprep.subr.bf16.mxu0 0
        %494 = vmatpush1.bf16.msra.mxu0 0
        %495 = vmatprep.mubr.bf16.mxu0 0
        %496 = vmatmul.mubr.bf16.gmra.mrb[0].mxu0 %v413
        %v497 = vpop.f32.mrb[0].mxu0
        %v498 = vadd.f32 %v407, %v497
        %v499 = vpop.f32.mrb[0].mxu0
        %v500 = vpop.f32.mrb[0].mxu0
        %v501 = vadd.f32 %v407, %v500
        %v502 = vpop.f32.mrb[0].mxu0
        %503 = vdwg.mxu0
        %v504 = vmul.f32 %v498, %v498
        %v505 = vmul.f32 %v501, %v501
        %v506 = vmul.f32 %v498, %v504
        %v507 = vmul.f32 %v501, %v505
        %v508 = vmul.f32 %v506, 0.044715
        %v509 = vmul.f32 %v507, 0.044715
        %v510 = vadd.f32 %v498, %v508
        %v511 = vadd.f32 %v501, %v509
        %v512 = vmul.f32 %v510, 0.7978846
        %v513 = vmul.f32 %v511, 0.7978846
        %v514 = vtanh.pop %v512
        %v515 = vtanh.pop %v513
        %v516 = vadd.f32 %v514, 1.0
        %v517 = vadd.f32 %v515, 1.0
        %v518 = vmul.f32 %v516, 0.5
        %v519 = vmul.f32 %v517, 0.5
        %v520 = vmul.f32 %v498, %v518
        %v521 = vmul.f32 %v501, %v519
        %v522 = vpack.c.bf16 %v521, %v520
        %v523 = vld [vmem:[#allocation8] sm:$0xf]
        %v524 = vld [vmem:[#allocation8 + $0x4] sm:$0xf]
        %v525 = vld [vmem:[#allocation8 + $0x8] sm:$0xf]
        %v526 = vld [vmem:[#allocation8 + $0xc] sm:$0xf]
        %v527 = vld [vmem:[#allocation8 + $0x10] sm:$0xf]
        %v528 = vld [vmem:[#allocation8 + $0x14] sm:$0xf]
        %v529 = vld [vmem:[#allocation8 + $0x18] sm:$0xf]
        %v530 = vld [vmem:[#allocation8 + $0x1c] sm:$0xf]
        %v531 = vld [vmem:[#allocation8 + $0x20] sm:$0xf]
        %v532 = vld [vmem:[#allocation8 + $0x24] sm:$0xf]
        %v533 = vld [vmem:[#allocation8 + $0x28] sm:$0xf]
        %v534 = vld [vmem:[#allocation8 + $0x2c] sm:$0xf]
        %v535 = vld [vmem:[#allocation8 + $0x30] sm:$0xf]
        %v536 = vld [vmem:[#allocation8 + $0x34] sm:$0xf]
        %v537 = vld [vmem:[#allocation8 + $0x38] sm:$0xf]
        %v538 = vld [vmem:[#allocation8 + $0x3c] sm:$0xf]
        %v539 = vld [vmem:[%s5] sm:$0x1]
        %v541 = vlaneseq
        %v542 = vshrl.u32 %v541, 7
        %v543 = vsub.s32 0, %v542
        %v544 = vrot.slane %v539, %v543
        %v562 = vunpack.c.l.b16 %v523
        %v563 = vunpack.c.l.b16 %v524
        %v564 = vunpack.c.l.b16 %v525
        %v565 = vunpack.c.l.b16 %v526
        %v566 = vunpack.c.l.b16 %v527
        %v567 = vunpack.c.l.b16 %v528
        %v568 = vunpack.c.l.b16 %v529
        %v569 = vunpack.c.l.b16 %v530
        %v570 = vunpack.c.l.b16 %v531
        %v571 = vunpack.c.l.b16 %v532
        %v572 = vunpack.c.l.b16 %v533
        %v573 = vunpack.c.l.b16 %v534
        %v574 = vunpack.c.l.b16 %v535
        %v575 = vunpack.c.l.b16 %v536
        %v576 = vunpack.c.l.b16 %v537
        %v577 = vunpack.c.l.b16 %v538
        %v578 = vpack.c.b16 %v563, %v562
        %v579 = vpack.c.b16 %v565, %v564
        %v580 = vpack.c.b16 %v567, %v566
        %v581 = vpack.c.b16 %v569, %v568
        %v582 = vpack.c.b16 %v571, %v570
        %v583 = vpack.c.b16 %v573, %v572
        %v584 = vpack.c.b16 %v575, %v574
        %v585 = vpack.c.b16 %v577, %v576
        %594 = vmatprep.subr.bf16.mxu0 0
        %595 = vmatpush1.bf16.msra.mxu0 %v578
        %596 = vmatprep.subr.bf16.mxu0 0
        %597 = vmatpush1.bf16.msra.mxu0 %v579
        %598 = vmatprep.subr.bf16.mxu0 0
        %599 = vmatpush1.bf16.msra.mxu0 %v580
        %600 = vmatprep.subr.bf16.mxu0 0
        %601 = vmatpush1.bf16.msra.mxu0 %v581
        %602 = vmatprep.subr.bf16.mxu0 0
        %603 = vmatpush1.bf16.msra.mxu0 %v582
        %604 = vmatprep.subr.bf16.mxu0 0
        %605 = vmatpush1.bf16.msra.mxu0 %v583
        %606 = vmatprep.subr.bf16.mxu0 0
        %607 = vmatpush1.bf16.msra.mxu0 %v584
        %608 = vmatprep.subr.bf16.mxu0 0
        %609 = vmatpush1.bf16.msra.mxu0 %v585
        %610 = vmatprep.subr.bf16.mxu0 0
        %611 = vmatpush1.bf16.msra.mxu0 0
        %612 = vmatprep.subr.bf16.mxu0 0
        %613 = vmatpush1.bf16.msra.mxu0 0
        %614 = vmatprep.subr.bf16.mxu0 0
        %615 = vmatpush1.bf16.msra.mxu0 0
        %616 = vmatprep.subr.bf16.mxu0 0
        %617 = vmatpush1.bf16.msra.mxu0 0
        %618 = vmatprep.subr.bf16.mxu0 0
        %619 = vmatpush1.bf16.msra.mxu0 0
        %620 = vmatprep.subr.bf16.mxu0 0
        %621 = vmatpush1.bf16.msra.mxu0 0
        %622 = vmatprep.subr.bf16.mxu0 0
        %623 = vmatpush1.bf16.msra.mxu0 0
        %624 = vmatprep.subr.bf16.mxu0 0
        %625 = vmatpush1.bf16.msra.mxu0 0
        %626 = vmatprep.mubr.bf16.mxu0 0
        %627 = vmatmul.mubr.bf16.gmra.mrb[0].mxu0 %v522
        %v628 = vpop.f32.mrb[0].mxu0
        %v629 = vadd.f32 %v544, %v628
        %v630 = vpop.f32.mrb[0].mxu0
        %v631 = vpop.f32.mrb[0].mxu0
        %v632 = vadd.f32 %v544, %v631
        %v633 = vpop.f32.mrb[0].mxu0
        %634 = vdwg.mxu0
        %v635 = vmax.f32 %v629, 0.0
        %v636 = vmax.f32 %v632, 0.0
        %v637 = vld [vmem:[#allocation2] sm:$0x3]
        %v638 = vld [vmem:[%s1] sm:$0x3]
        %vm639 = vcmask 130048
        %v641 = vsel %vm639, %v638, 0
        %643 = vmatprep.subr.mxu0 0.0
        %644 = vmatpush1.msra.mxu0 %v635
        %645 = vmatprep.subr.mxu0 0.0
        %646 = vmatpush1.msra.mxu0 %v636
        %647 = vmatprep.subr.mxu0 0.0
        %648 = vmatpush1.msra.mxu0 0.0
        %649 = vmatprep.subr.mxu0 0.0
        %650 = vmatpush1.msra.mxu0 0.0
        %651 = vmatprep.subr.mxu0 0.0
        %652 = vmatpush1.msra.mxu0 0.0
        %653 = vmatprep.subr.mxu0 0.0
        %654 = vmatpush1.msra.mxu0 0.0
        %655 = vmatprep.subr.mxu0 0.0
        %656 = vmatpush1.msra.mxu0 0.0
        %657 = vmatprep.subr.mxu0 0.0
        %658 = vmatpush1.msra.mxu0 0.0
        %659 = vmatprep.subr.mxu0 0.0
        %660 = vmatpush1.msra.mxu0 0.0
        %661 = vmatprep.subr.mxu0 0.0
        %662 = vmatpush1.msra.mxu0 0.0
        %663 = vmatprep.subr.mxu0 0.0
        %664 = vmatpush1.msra.mxu0 0.0
        %665 = vmatprep.subr.mxu0 0.0
        %666 = vmatpush1.msra.mxu0 0.0
        %667 = vmatprep.subr.mxu0 0.0
        %668 = vmatpush1.msra.mxu0 0.0
        %669 = vmatprep.subr.mxu0 0.0
        %670 = vmatpush1.msra.mxu0 0.0
        %671 = vmatprep.subr.mxu0 0.0
        %672 = vmatpush1.msra.mxu0 0.0
        %673 = vmatprep.subr.mxu0 0.0
        %674 = vmatpush1.msra.mxu0 0.0
        %675 = vmatprep.subr.mxu0 0.0
        %676 = vmatpush1.msra.mxu0 0.0
        %677 = vmatprep.subr.mxu0 0.0
        %678 = vmatpush1.msra.mxu0 0.0
        %679 = vmatprep.subr.mxu0 0.0
        %680 = vmatpush1.msra.mxu0 0.0
        %681 = vmatprep.subr.mxu0 0.0
        %682 = vmatpush1.msra.mxu0 0.0
        %683 = vmatprep.subr.mxu0 0.0
        %684 = vmatpush1.msra.mxu0 0.0
        %685 = vmatprep.subr.mxu0 0.0
        %686 = vmatpush1.msra.mxu0 0.0
        %687 = vmatprep.subr.mxu0 0.0
        %688 = vmatpush1.msra.mxu0 0.0
        %689 = vmatprep.subr.mxu0 0.0
        %690 = vmatpush1.msra.mxu0 0.0
        %691 = vmatprep.subr.mxu0 0.0
        %692 = vmatpush1.msra.mxu0 0.0
        %693 = vmatprep.subr.mxu0 0.0
        %694 = vmatpush1.msra.mxu0 0.0
        %695 = vmatprep.subr.mxu0 0.0
        %696 = vmatpush1.msra.mxu0 0.0
        %697 = vmatprep.subr.mxu0 0.0
        %698 = vmatpush1.msra.mxu0 0.0
        %699 = vmatprep.subr.mxu0 0.0
        %700 = vmatpush1.msra.mxu0 0.0
        %701 = vmatprep.subr.mxu0 0.0
        %702 = vmatpush1.msra.mxu0 0.0
        %703 = vmatprep.subr.mxu0 0.0
        %704 = vmatpush1.msra.mxu0 0.0
        %705 = vmatprep.subr.mxu0 0.0
        %706 = vmatpush1.msra.mxu0 0.0
        %707 = vmatprep.mubr.f32.mxu0 0.0
        %708 = vmatmul.mubr.f32.gmra.mrb[0].mxu0 %v641
        %v709 = vpop.f32.mrb[0].mxu0
        %v710 = vadd.f32 0.0, %v709
        %v711 = vpop.f32.mrb[0].mxu0
        %712 = vdwg.mxu0
        %v713 = vadd.f32 %v637, %v710
        %714 = vst [vmem:[#allocation2] sm:$0x3] %v713
        %p715 = scmp.eq.s32.totalorder %s30, 1
        // Predicated region
        $region73: #{tpu_custom_call.1} parent=51 // pred_check
          %p716 = pneg %p715
        $region74: #{tpu_custom_call.1} parent=51 // pred_check_branch
          %718 = sbr.rel (%p716) target = $region76
        $region75: #{tpu_custom_call.1} parent=51 // pred_region
          %v719 = vld [vmem:[#allocation2] sm:$0x3]
          %v720 = vmul.f32 %v719, 0.0625
          %v721 = vld [vmem:[#allocation9] sm:$0xff]
          %v722 = vld [vmem:[#allocation9 + $0x8] sm:$0xff]
          %v723 = vld [vmem:[#allocation9 + $0x10] sm:$0xff]
          %v724 = vld [vmem:[#allocation9 + $0x18] sm:$0xff]
          %v725 = vld [vmem:[#allocation9 + $0x20] sm:$0xff]
          %v726 = vld [vmem:[#allocation9 + $0x28] sm:$0xff]
          %v727 = vld [vmem:[#allocation9 + $0x30] sm:$0xff]
          %v728 = vld [vmem:[#allocation9 + $0x38] sm:$0xff]
          %v729 = vld [vmem:[#allocation9 + $0x40] sm:$0xff]
          %v730 = vld [vmem:[#allocation9 + $0x48] sm:$0xff]
          %v731 = vld [vmem:[#allocation9 + $0x50] sm:$0xff]
          %v732 = vld [vmem:[#allocation9 + $0x58] sm:$0xff]
          %v733 = vld [vmem:[#allocation9 + $0x60] sm:$0xff]
          %v734 = vld [vmem:[#allocation9 + $0x68] sm:$0xff]
          %v735 = vld [vmem:[#allocation9 + $0x70] sm:$0xff]
          %v736 = vld [vmem:[#allocation9 + $0x78] sm:$0xff]
          %v737 = vld [vmem:[%s7] sm:$0x1]
          %v739 = vlaneseq
          %v740 = vshrl.u32 %v739, 7
          %v741 = vsub.s32 0, %v740
          %v742 = vrot.slane %v737, %v741
          %744 = vmatprep.subr.mxu0 0.0
          %745 = vmatpush1.msra.mxu0 %v721
          %746 = vmatprep.subr.mxu0 0.0
          %747 = vmatpush1.msra.mxu0 %v722
          %748 = vmatprep.subr.mxu0 0.0
          %749 = vmatpush1.msra.mxu0 %v723
          %750 = vmatprep.subr.mxu0 0.0
          %751 = vmatpush1.msra.mxu0 %v724
          %752 = vmatprep.subr.mxu0 0.0
          %753 = vmatpush1.msra.mxu0 %v725
          %754 = vmatprep.subr.mxu0 0.0
          %755 = vmatpush1.msra.mxu0 %v726
          %756 = vmatprep.subr.mxu0 0.0
          %757 = vmatpush1.msra.mxu0 %v727
          %758 = vmatprep.subr.mxu0 0.0
          %759 = vmatpush1.msra.mxu0 %v728
          %760 = vmatprep.subr.mxu0 0.0
          %761 = vmatpush1.msra.mxu0 %v729
          %762 = vmatprep.subr.mxu0 0.0
          %763 = vmatpush1.msra.mxu0 %v730
          %764 = vmatprep.subr.mxu0 0.0
          %765 = vmatpush1.msra.mxu0 %v731
          %766 = vmatprep.subr.mxu0 0.0
          %767 = vmatpush1.msra.mxu0 %v732
          %768 = vmatprep.subr.mxu0 0.0
          %769 = vmatpush1.msra.mxu0 %v733
          %770 = vmatprep.subr.mxu0 0.0
          %771 = vmatpush1.msra.mxu0 %v734
          %772 = vmatprep.subr.mxu0 0.0
          %773 = vmatpush1.msra.mxu0 %v735
          %774 = vmatprep.subr.mxu0 0.0
          %775 = vmatpush1.msra.mxu0 %v736
          %776 = vmatprep.subr.mxu0 0.0
          %777 = vmatpush1.msra.mxu0 0.0
          %778 = vmatprep.subr.mxu0 0.0
          %779 = vmatpush1.msra.mxu0 0.0
          %780 = vmatprep.subr.mxu0 0.0
          %781 = vmatpush1.msra.mxu0 0.0
          %782 = vmatprep.subr.mxu0 0.0
          %783 = vmatpush1.msra.mxu0 0.0
          %784 = vmatprep.subr.mxu0 0.0
          %785 = vmatpush1.msra.mxu0 0.0
          %786 = vmatprep.subr.mxu0 0.0
          %787 = vmatpush1.msra.mxu0 0.0
          %788 = vmatprep.subr.mxu0 0.0
          %789 = vmatpush1.msra.mxu0 0.0
          %790 = vmatprep.subr.mxu0 0.0
          %791 = vmatpush1.msra.mxu0 0.0
          %792 = vmatprep.subr.mxu0 0.0
          %793 = vmatpush1.msra.mxu0 0.0
          %794 = vmatprep.subr.mxu0 0.0
          %795 = vmatpush1.msra.mxu0 0.0
          %796 = vmatprep.subr.mxu0 0.0
          %797 = vmatpush1.msra.mxu0 0.0
          %798 = vmatprep.subr.mxu0 0.0
          %799 = vmatpush1.msra.mxu0 0.0
          %800 = vmatprep.subr.mxu0 0.0
          %801 = vmatpush1.msra.mxu0 0.0
          %802 = vmatprep.subr.mxu0 0.0
          %803 = vmatpush1.msra.mxu0 0.0
          %804 = vmatprep.subr.mxu0 0.0
          %805 = vmatpush1.msra.mxu0 0.0
          %806 = vmatprep.subr.mxu0 0.0
          %807 = vmatpush1.msra.mxu0 0.0
          %808 = vmatprep.mubr.f32.mxu0 0.0
          %809 = vmatmul.mubr.f32.gmra.mrb[0].mxu0 %v720
          %v810 = vpop.f32.mrb[0].mxu0
          %v811 = vadd.f32 %v742, %v810
          %v812 = vpop.f32.mrb[0].mxu0
          %813 = vdwg.mxu0
          %814 = vst [vmem:[#allocation11] sm:$0x3] %v811
        $region76: #{tpu_custom_call.1} parent=51 // pred_fallthru
          _
        // Predicated region
        $region77: #{tpu_custom_call.1} parent=51 // pred_check
          %p815 = pneg %p230
        $region78: #{tpu_custom_call.1} parent=51 // pred_check_branch
          %817 = sbr.rel (%p815) target = $region80
        $region79: #{tpu_custom_call.1} parent=51 // pred_region
          %s819 = ssub.s32 32, 32
          %820 = vsyncadd [#allocation5], %s819
          %s821 = smul.addr %s29, 32
          %s822 = scalar_lea.hbm %s8, %s821
          %s824 = sshll.u32 [#allocation11], 4
          %s825 = int_to_ptr.vmem [resolvable:$true] %s824
          %827 = dma.vmem_to_hbm [thread:$0]  %s825, 32, %s822, [#allocation5]
        $region80: #{tpu_custom_call.1} parent=51 // pred_fallthru
          _
        // Predicated region
        $region81: #{tpu_custom_call.1} parent=51 // pred_check
          %p828 = pneg %p230
        $region82: #{tpu_custom_call.1} parent=51 // pred_check_branch
          %830 = sbr.rel (%p828) target = $region84
        $region83: #{tpu_custom_call.1} parent=51 // pred_region
          %831 = dma.done [#allocation5], 32
        $region84: #{tpu_custom_call.1} parent=51 // pred_fallthru
          _
      $region52: #{tpu_custom_call.1} parent=5 // pred_fallthru
        _
      %p832 = scmp.le.s32.totalorder 2, %s20
      // Predicated region
      $region85: #{tpu_custom_call.1} parent=5 // pred_check
        %p833 = pneg %p832
      $region86: #{tpu_custom_call.1} parent=5 // pred_check_branch
        %835 = sbr.rel (%p833) target = $region88
      $region87: #{tpu_custom_call.1} parent=5 // pred_region
        %s836 = ssub.s32 %s20, 2
      $region88: #{tpu_custom_call.1} parent=5 // pred_fallthru
        _
    $region6: #{tpu_custom_call.1} parent=1 // loop_footer
      %s24 = sadd.s32 1, %s20
    $region7: #{tpu_custom_call.1} parent=1 // loop_footer_branch
      %19 = sbr.rel target = $region3
    $region8: #{tpu_custom_call.1} parent=1 // loop_exit
      _
    %837 = vsyncpa [#allocation4], 1
    %s838 = scalar_lea.sflag [#allocation4], 1
    %839 = vsyncpa %s838, 1
    %840 = vsyncpa [#allocation7], 1
    %841 = vsyncpa [#allocation10], 1
    %842 = vsyncpa [#allocation5], 1
    %s843 = scalar_lea.sflag [#allocation5], 1
    %844 = vsyncpa %s843, 1

</llo_original>
